<compile_context>
chip_gen: v7x
topology: tpu7x:2x2x1
jax: 0.10.0
libtpu: 0.0.40
codegen_flags: <defaults>
</compile_context>

<pallas_src>
import jax
import jax.numpy as jnp
import numpy as np
from jax.experimental import pallas as pl
from jax.experimental.pallas import tpu as pltpu


def _round_up(x, m):
    return ((x + m - 1) // m) * m


def _split_dim(dim, max_tile, align):
    """Split `dim` into equal tiles <= max_tile, each a multiple of `align`.

    Returns (num_tiles, tile, padded_dim). A single tile keeps the exact dim
    (full-dim blocks are always layout-legal), so no padding is introduced.
    """
    if dim <= max_tile:
        return 1, dim, dim
    num = -(-dim // max_tile)                  # ceil
    tile = _round_up(-(-dim // num), align)    # near-equal split, aligned
    return num, tile, tile * num


def _linear_kernel_single(x_ref, wt_ref, b_ref, o_ref):
    # Whole problem resident in VMEM: no grid, no accumulator, no epilogue.
    o_ref[...] = (
        jnp.dot(x_ref[...].astype(wt_ref.dtype), wt_ref[...],
                preferred_element_type=jnp.float32)
        + b_ref[...]
    ).astype(o_ref.dtype)


def _linear_kernel_f32out(x_ref, wt_ref, b_ref, o_ref):
    # f32 output: accumulate straight into the resident output block.
    # Bias is folded into the k == 0 init so there is no epilogue pass at all.
    @pl.when(pl.program_id(2) == 0)
    def _():
        o_ref[...] = jnp.broadcast_to(b_ref[...], o_ref.shape)

    o_ref[...] += jnp.dot(x_ref[...].astype(wt_ref.dtype), wt_ref[...],
                          preferred_element_type=jnp.float32)


def _linear_kernel_castout(x_ref, wt_ref, b_ref, o_ref, acc_ref):
    # Narrow output dtype: f32 scratch accumulator + cast-only epilogue.
    @pl.when(pl.program_id(2) == 0)
    def _():
        acc_ref[...] = jnp.broadcast_to(b_ref[...], acc_ref.shape)

    acc_ref[...] += jnp.dot(x_ref[...].astype(wt_ref.dtype), wt_ref[...],
                            preferred_element_type=jnp.float32)

    @pl.when(pl.program_id(2) == pl.num_programs(2) - 1)
    def _():
        o_ref[...] = acc_ref[...].astype(o_ref.dtype)


def _vmem_limit_bytes():
    # Re-derive per generation: v7x has 64 MiB physical VMEM, v5e/v6e 128 MiB.
    # Keep ~25% headroom for Mosaic-internal scratch; cap at 96 MiB.
    cap = 64 * 1024 * 1024
    try:
        info = pltpu.get_tpu_info()
        cap = int(getattr(info, "vmem_capacity_bytes", cap) or cap)
    except Exception:
        pass
    return min((cap * 3) // 4, 96 * 1024 * 1024)


def make_linear_pallas(weight, bias=None, *, tm=512, tn=512, tk=512, param_dtype=None):
    """Weights-stationary Pallas linear: forward(x) = x @ W^T + b.

    weight: (out_features, in_features)  [PyTorch nn.Linear layout]
    bias  : (out_features,) or None
    param_dtype: storage dtype for the repacked W^T slab (e.g. jnp.bfloat16 to halve
      weight HBM traffic / double MXU rate). Defaults to weight.dtype so outputs match
      the float PyTorch reference within tight tolerance.
    """
    out_features, in_features = weight.shape
    param_dtype = param_dtype or weight.dtype

    n_tiles, tn_, n_pad = _split_dim(out_features, tn, 128)
    k_tiles, tk_, k_pad = _split_dim(in_features, tk, 128)

    # One-time repack: (K, N)-layout W^T, padded only to the tile grid actually used.
    wt = weight.T.astype(param_dtype)
    if (k_pad, n_pad) != (in_features, out_features):
        wt = (jnp.zeros((k_pad, n_pad), param_dtype)
              .at[:in_features, :out_features].set(wt))
    b2d = jnp.zeros((1, n_pad), jnp.float32)
    if bias is not None:
        b2d = b2d.at[0, :out_features].set(bias.astype(jnp.float32))

    vmem_limit = _vmem_limit_bytes()

    def forward(x):
        lead = x.shape[:-1]
        m = 1
        for d in lead:
            m *= int(d)
        x2d = x.reshape(m, in_features)
        out_dtype = x.dtype

        # ---------- single-block fast path: whole problem in one VMEM tile ----------
        if n_tiles == 1 and k_tiles == 1 and m <= tm:
            out = pl.pallas_call(
                _linear_kernel_single,
                out_shape=jax.ShapeDtypeStruct((m, out_features), out_dtype),
            )(x2d, wt, b2d)
            return out.reshape(*lead, out_features)

        # ---------- tiled path -------------------------------------------------------
        m_tiles, tm_, m_pad = _split_dim(m, tm, 8)
        # Megacore: guarantee >= 2 parallel (i, j) tiles when a K loop exists so both
        # v7x TensorCores get work (no effect on v5e/v6e correctness).
        if m_tiles * n_tiles == 1 and k_tiles > 1 and m >= 16:
            m_tiles = 2
            tm_ = _round_up(-(-m // 2), 8)
            m_pad = 2 * tm_

        if (m_pad, k_pad) != (m, in_features):
            x2d = jnp.pad(x2d, ((0, m_pad - m), (0, k_pad - in_features)))

        grid = (m_tiles, n_tiles, k_tiles)

        if out_dtype == jnp.float32:
            kernel = _linear_kernel_f32out
            scratch = ()
        else:
            kernel = _linear_kernel_castout
            scratch = (pltpu.VMEM((tm_, tn_), jnp.float32),)

        bytes_accessed = (
            x2d.size * x2d.dtype.itemsize * n_tiles        # x re-streamed per N tile
            + wt.size * wt.dtype.itemsize * m_tiles        # W^T re-streamed per M tile
            + b2d.size * b2d.dtype.itemsize * m_tiles
            + m_pad * n_pad * jnp.dtype(out_dtype).itemsize
        )
        cost = pl.CostEstimate(
            flops=2 * m_pad * n_pad * k_pad,
            transcendentals=0,
            bytes_accessed=int(bytes_accessed),
        )

        out = pl.pallas_call(
            kernel,
            out_shape=jax.ShapeDtypeStruct((m_pad, n_pad), out_dtype),
            grid_spec=pltpu.PrefetchScalarGridSpec(
                num_scalar_prefetch=0,
                grid=grid,
                in_specs=[
                    pl.BlockSpec((tm_, tk_), lambda i, j, k: (i, k)),
                    pl.BlockSpec((tk_, tn_), lambda i, j, k: (k, j)),
                    pl.BlockSpec((1, tn_), lambda i, j, k: (0, j)),
                ],
                out_specs=pl.BlockSpec((tm_, tn_), lambda i, j, k: (i, j)),
                scratch_shapes=scratch,
            ),
            compiler_params=pltpu.CompilerParams(
                dimension_semantics=("parallel", "parallel", "arbitrary"),
                vmem_limit_bytes=vmem_limit,
            ),
            cost_estimate=cost,
        )(x2d, wt, b2d)

        if (m_pad, n_pad) != (m, out_features):
            out = out[:m, :out_features]
        return out.reshape(*lead, out_features)

    return forward


if __name__ == "__main__":
    # TestQuantizedLinearModel(in_chl_, out_chl_, bias=True) -> nn.Linear(in, out)
    in_chl, out_chl = 32, 16
    batch, seq = 2, 8

    key = jax.random.PRNGKey(0)
    kx, kw, kb = jax.random.split(key, 3)

    # torch.nn.Linear default init: U(-1/sqrt(in_features), 1/sqrt(in_features)).
    bound = 1.0 / float(np.sqrt(in_chl))
    weight = jax.random.uniform(kw, (out_chl, in_chl), jnp.float32, -bound, bound)
    bias = jax.random.uniform(kb, (out_chl,), jnp.float32, -bound, bound)
    x = jax.random.normal(kx, (batch, seq, in_chl), jnp.float32)

    linear = make_linear_pallas(weight, bias)   # one-time W^T repack
    y = linear(x)                               # single-block fast path
    jax.block_until_ready(y)

    y_ref = x @ weight.T + bias
    assert y.shape == (batch, seq, out_chl)
    assert jnp.allclose(y, y_ref, atol=1e-5, rtol=1e-5), float(jnp.max(jnp.abs(y - y_ref)))

    # Also exercise the tiled (K-accumulating, megacore-split) path once.
    in2, out2, m2 = 640, 256, 64
    k2w, k2b, k2x = jax.random.split(jax.random.PRNGKey(1), 3)
    b2 = 1.0 / float(np.sqrt(in2))
    w_big = jax.random.uniform(k2w, (out2, in2), jnp.float32, -b2, b2)
    bias_big = jax.random.uniform(k2b, (out2,), jnp.float32, -b2, b2)
    x_big = jax.random.normal(k2x, (1, m2, in2), jnp.float32)
    y_big = make_linear_pallas(w_big, bias_big)(x_big)
    jax.block_until_ready(y_big)
    ref_big = (np.asarray(x_big, np.float64) @ np.asarray(w_big, np.float64).T
               + np.asarray(bias_big, np.float64))
    assert y_big.shape == (1, m2, out2)
    assert np.allclose(np.asarray(y_big, np.float64), ref_big, atol=2e-2, rtol=2e-2)

    print("KERNEL_OK")
</pallas_src>

<mosaic_0001>
module attributes {stable_mosaic.version = 11 : i64} {
  func.func @_linear_kernel_single(%arg0: memref<16x32xf32, #tpu.memory_space<vmem>>, %arg1: memref<32x16xf32, #tpu.memory_space<vmem>>, %arg2: memref<1x16xf32, #tpu.memory_space<vmem>>, %arg3: memref<16x16xf32, #tpu.memory_space<vmem>>) attributes {dimension_semantics = [], scalar_prefetch = 0 : i64, scratch_operands = 0 : i64, tpu.core_type = #tpu.core_type<tc>} {
    %c0 = arith.constant 0 : index
    %c0_0 = arith.constant 0 : index
    %0 = vector.load %arg0[%c0, %c0_0] : memref<16x32xf32, #tpu.memory_space<vmem>>, vector<16x32xf32>
    %c0_1 = arith.constant 0 : index
    %c0_2 = arith.constant 0 : index
    %1 = vector.load %arg1[%c0_1, %c0_2] : memref<32x16xf32, #tpu.memory_space<vmem>>, vector<32x16xf32>
    %cst = arith.constant dense<0.000000e+00> : vector<16x16xf32>
    %2 = tpu.matmul %0, %1, %cst {dimension_numbers = #tpu.dot_dimension_numbers<[1], [0], [0], [1], [0, 0, 1, 1], [], []>} : vector<16x32xf32>, vector<32x16xf32>, vector<16x16xf32> -> vector<16x16xf32>
    %c0_3 = arith.constant 0 : index
    %c0_4 = arith.constant 0 : index
    %3 = vector.load %arg2[%c0_3, %c0_4] : memref<1x16xf32, #tpu.memory_space<vmem>>, vector<1x16xf32>
    %4 = vector.broadcast %3 : vector<1x16xf32> to vector<16x16xf32>
    %5 = arith.addf %2, %4 : vector<16x16xf32>
    %c0_5 = arith.constant 0 : index
    %c0_6 = arith.constant 0 : index
    %6 = vector.load %arg3[%c0_5, %c0_6] : memref<16x16xf32, #tpu.memory_space<vmem>>, vector<16x16xf32>
    tpu.vector_store %arg3[%c0_5, %c0_6], %5 {strides = array<i32>} : memref<16x16xf32, #tpu.memory_space<vmem>>, vector<16x16xf32>,
    return
  }
}

</mosaic_0001>

<llo_original>
// kernel: tpu_custom_call.1
$region0: #{tpu_custom_call.1}
  #allocation0 [shape = 'u32[]', space=smem, size = 0x4, offset = 0x4, fixed_abs, tag = 'smem constant byte address 0x4 - core index']
  #allocation1 [shape = 'u32[144,128]{1,0:T(1,128)}', space=vmem, size = 0x12000, scoped, tag = 'internal scratch']
  %s0 = inlined_call_operand.vmem [shape: f32[16,32], index: 0, kind: input, shape index: {}]
  %s1 = inlined_call_operand.vmem [shape: f32[32,16], index: 1, kind: input, shape index: {}]
  %s2 = inlined_call_operand.vmem [shape: f32[1,16], index: 2, kind: input, shape index: {}]
  %s3 = inlined_call_operand.hbm [shape: f32[16,16], index: 3, kind: output, shape index: {}]
  %s4 = sld [smem:[#allocation0]]
  $region22: #{tpu_custom_call.1} parent=0
    _
  %s6 = ssub.s32 1, %s4
  %s7 = scalar_select 0, %s6, %s4
  $region1: #{tpu_custom_call.1} parent=0
    #allocation2 [shape = 'u8[8192]{0}', space=vmem, size = 0x2000, scoped, tag = 'output window, operand 0, single buffered']
    #allocation3 [shape = 's32[1]{0}', space=sflag, size = 0x4, scoped, tag = 'scoped memory for tpu_custom_call.1']
    %8 = vsyncpa [#allocation3], 0
    // Predicated region
    $region2: #{tpu_custom_call.1} parent=1 // pred_check
      _
    $region3: #{tpu_custom_call.1} parent=1 // pred_check_branch
      %10 = sbr.rel (0) target = $region5
    $region4: #{tpu_custom_call.1} parent=1 // pred_region
      _
    $region5: #{tpu_custom_call.1} parent=1 // pred_fallthru
      _
    // Predicated region
    $region6: #{tpu_custom_call.1} parent=1 // pred_check
      _
    $region7: #{tpu_custom_call.1} parent=1 // pred_check_branch
      %12 = sbr.rel (0) target = $region9
    $region8: #{tpu_custom_call.1} parent=1 // pred_region
      _
    $region9: #{tpu_custom_call.1} parent=1 // pred_fallthru
      _
    // Predicated region
    $region10: #{tpu_custom_call.1} parent=1 // pred_check
      _
    $region11: #{tpu_custom_call.1} parent=1 // pred_check_branch
      %14 = sbr.rel (0) target = $region13
    $region12: #{tpu_custom_call.1} parent=1 // pred_region
      _
    $region13: #{tpu_custom_call.1} parent=1 // pred_fallthru
      _
    %v15 = vld [vmem:[%s0] sm:$0xff]
    %v16 = vld [vmem:[%s0 + $0x8] sm:$0xff]
    %v17 = vld [vmem:[%s1] sm:$0xff]
    %v18 = vld [vmem:[%s1 + $0x8] sm:$0xff]
    %v19 = vld [vmem:[%s1 + $0x10] sm:$0xff]
    %v20 = vld [vmem:[%s1 + $0x18] sm:$0xff]
    %v21 = vld [vmem:[%s2] sm:$0x1]
    %v23 = vlaneseq
    %v24 = vshrl.u32 %v23, 7
    %v25 = vsub.s32 0, %v24
    %v26 = vrot.slane %v21, %v25
    %vm28 = vcmask 261120
    %v30 = vsel %vm28, %v15, 0
    %v33 = vsel %vm28, %v16, 0
    %35 = vmatprep.subr.mxu0 0.0
    %36 = vmatpush1.msra.mxu0 %v17
    %37 = vmatprep.subr.mxu0 0.0
    %38 = vmatpush1.msra.mxu0 %v18
    %39 = vmatprep.subr.mxu0 0.0
    %40 = vmatpush1.msra.mxu0 %v19
    %41 = vmatprep.subr.mxu0 0.0
    %42 = vmatpush1.msra.mxu0 %v20
    %43 = vmatprep.subr.mxu0 0.0
    %44 = vmatpush1.msra.mxu0 0.0
    %45 = vmatprep.subr.mxu0 0.0
    %46 = vmatpush1.msra.mxu0 0.0
    %47 = vmatprep.subr.mxu0 0.0
    %48 = vmatpush1.msra.mxu0 0.0
    %49 = vmatprep.subr.mxu0 0.0
    %50 = vmatpush1.msra.mxu0 0.0
    %51 = vmatprep.subr.mxu0 0.0
    %52 = vmatpush1.msra.mxu0 0.0
    %53 = vmatprep.subr.mxu0 0.0
    %54 = vmatpush1.msra.mxu0 0.0
    %55 = vmatprep.subr.mxu0 0.0
    %56 = vmatpush1.msra.mxu0 0.0
    %57 = vmatprep.subr.mxu0 0.0
    %58 = vmatpush1.msra.mxu0 0.0
    %59 = vmatprep.subr.mxu0 0.0
    %60 = vmatpush1.msra.mxu0 0.0
    %61 = vmatprep.subr.mxu0 0.0
    %62 = vmatpush1.msra.mxu0 0.0
    %63 = vmatprep.subr.mxu0 0.0
    %64 = vmatpush1.msra.mxu0 0.0
    %65 = vmatprep.subr.mxu0 0.0
    %66 = vmatpush1.msra.mxu0 0.0
    %67 = vmatprep.subr.mxu0 0.0
    %68 = vmatpush1.msra.mxu0 0.0
    %69 = vmatprep.subr.mxu0 0.0
    %70 = vmatpush1.msra.mxu0 0.0
    %71 = vmatprep.subr.mxu0 0.0
    %72 = vmatpush1.msra.mxu0 0.0
    %73 = vmatprep.subr.mxu0 0.0
    %74 = vmatpush1.msra.mxu0 0.0
    %75 = vmatprep.subr.mxu0 0.0
    %76 = vmatpush1.msra.mxu0 0.0
    %77 = vmatprep.subr.mxu0 0.0
    %78 = vmatpush1.msra.mxu0 0.0
    %79 = vmatprep.subr.mxu0 0.0
    %80 = vmatpush1.msra.mxu0 0.0
    %81 = vmatprep.subr.mxu0 0.0
    %82 = vmatpush1.msra.mxu0 0.0
    %83 = vmatprep.subr.mxu0 0.0
    %84 = vmatpush1.msra.mxu0 0.0
    %85 = vmatprep.subr.mxu0 0.0
    %86 = vmatpush1.msra.mxu0 0.0
    %87 = vmatprep.subr.mxu0 0.0
    %88 = vmatpush1.msra.mxu0 0.0
    %89 = vmatprep.subr.mxu0 0.0
    %90 = vmatpush1.msra.mxu0 0.0
    %91 = vmatprep.subr.mxu0 0.0
    %92 = vmatpush1.msra.mxu0 0.0
    %93 = vmatprep.subr.mxu0 0.0
    %94 = vmatpush1.msra.mxu0 0.0
    %95 = vmatprep.subr.mxu0 0.0
    %96 = vmatpush1.msra.mxu0 0.0
    %97 = vmatprep.subr.mxu0 0.0
    %98 = vmatpush1.msra.mxu0 0.0
    %99 = vmatprep.mubr.f32.mxu0 0.0
    %100 = vmatmul.mubr.f32.gmra.mrb[0].mxu0 %v30
    %v101 = vpop.f32.mrb[0].mxu0
    %v102 = vadd.f32 %v26, %v101
    %v103 = vpop.f32.mrb[0].mxu0
    %104 = vmatprep.mubr.f32.mxu0 0.0
    %105 = vmatmul.mubr.f32.gmra.mrb[0].mxu0 %v33
    %v106 = vpop.f32.mrb[0].mxu0
    %v107 = vadd.f32 %v26, %v106
    %v108 = vpop.f32.mrb[0].mxu0
    %109 = vdwg.mxu0
    %vm110 = vcmask 130048
    %111 = vst.msk [vmem:[#allocation2] sm:$0xff] %vm110, %v102
    %112 = vst.msk [vmem:[#allocation2 + $0x8] sm:$0xff] %vm110, %v107
    // Predicated region
    $region14: #{tpu_custom_call.1} parent=1 // pred_check
      _
    $region15: #{tpu_custom_call.1} parent=1 // pred_check_branch
      %114 = sbr.rel (0) target = $region17
    $region16: #{tpu_custom_call.1} parent=1 // pred_region
      %s116 = ssub.s32 256, 256
      %117 = vsyncadd [#allocation3], %s116
      %s118 = sshll.u32 [#allocation2], 4
      %s119 = int_to_ptr.vmem [resolvable:$true] %s118
      %124 = dma.vmem_to_hbm [thread:$0]  %s119, 256, %s3, [#allocation3], 128, 128, 8
    $region17: #{tpu_custom_call.1} parent=1 // pred_fallthru
      _
    // Predicated region
    $region18: #{tpu_custom_call.1} parent=1 // pred_check
      _
    $region19: #{tpu_custom_call.1} parent=1 // pred_check_branch
      %126 = sbr.rel (0) target = $region21
    $region20: #{tpu_custom_call.1} parent=1 // pred_region
      %127 = dma.done [#allocation3], 256
    $region21: #{tpu_custom_call.1} parent=1 // pred_fallthru
      _
    %128 = vsyncpa [#allocation3], 1

</llo_original>
